<compile_context>
chip_gen: v6e
topology: v6e:2x2x1
jax: 0.10.0
libtpu: 0.0.40
codegen_flags: <defaults>
</compile_context>

<pallas_src>
import functools

import jax
import jax.numpy as jnp
from jax.experimental import pallas as pl
from jax.experimental.pallas import tpu as pltpu


# -------------- Pass 1 (small Cin): folded im2col + single MXU contraction ---

def _conv_fold_kernel(x_ref, w_ref, mask_ref, y_ref, stat_ref, strip_ref, *,
                      tap_offsets, cin, t_p, single_tile):
    """Grid step (sample i, spatial tile j, cout tile co).

    x_ref    : (1, Cin, L)          flattened zero-padded input sample (mxu dtype)
    w_ref    : (Cout_t, Cin*KH*KW)  folded weight slab                 (mxu dtype)
    mask_ref : (1, t_p)             1.0 on valid output positions      (f32)
    y_ref    : (1, Cout_t, t_p)     wide conv output tile (lane-dense)
    stat_ref : (1, 1, Cout_t, 2)    per-tile [sum, sum-of-squares] over valid pos.
    strip_ref: (Cin*KH*KW, t_p)     VMEM scratch im2col strip, reused across co.
    """
    if single_tile:
        p0 = 0
    else:
        p0 = pl.program_id(1) * t_p
        if t_p % 128 == 0:
            p0 = pl.multiple_of(p0, 128)

    # Assemble the strip once per (sample, spatial tile); every Cout tile
    # (innermost, "arbitrary" grid axis) reuses it.
    @pl.when(pl.program_id(2) == 0)
    def _():
        for t, off in enumerate(tap_offsets):              # static unroll
            strip_ref[pl.ds(t * cin, cin), :] = x_ref[0, :, pl.ds(p0 + off, t_p)]

    acc = jnp.dot(w_ref[...], strip_ref[...],
                  preferred_element_type=jnp.float32)       # (Cout_t, t_p) f32
    y_ref[0] = acc.astype(y_ref.dtype)

    # BatchNorm partial statistics over the valid output positions (f32).
    yv = acc * mask_ref[...]
    stat_ref[0, 0, :, 0:1] = jnp.sum(yv, axis=1, keepdims=True)
    stat_ref[0, 0, :, 1:2] = jnp.sum(yv * acc, axis=1, keepdims=True)


# -------------- Pass 1 (large Cin): per-tap matmuls fed straight from the ref -

def _conv_taps_kernel(x_ref, w_ref, mask_ref, y_ref, stat_ref, *,
                      tap_offsets, t_p, single_tile):
    """Same contract as _conv_fold_kernel but w_ref is (KH*KW, Cout_t, Cin) and
    each tap is a K=Cin matmul fed directly from a ref slice (no live window)."""
    if single_tile:
        p0 = 0
    else:
        p0 = pl.program_id(1) * t_p
        if t_p % 128 == 0:
            p0 = pl.multiple_of(p0, 128)

    cout_t = w_ref.shape[1]
    acc = jnp.zeros((cout_t, t_p), jnp.float32)
    for t, off in enumerate(tap_offsets):                   # static unroll
        acc += jnp.dot(w_ref[t], x_ref[0, :, pl.ds(p0 + off, t_p)],
                       preferred_element_type=jnp.float32)
    y_ref[0] = acc.astype(y_ref.dtype)

    yv = acc * mask_ref[...]
    stat_ref[0, 0, :, 0:1] = jnp.sum(yv, axis=1, keepdims=True)
    stat_ref[0, 0, :, 1:2] = jnp.sum(yv * acc, axis=1, keepdims=True)


# -------------- Pass 2: BN scale/shift + PReLU + wide->compact compaction -----

def _bn_prelu_kernel(xw_ref, par_ref, o_ref, *, oh, ow, wp, sh, sw):
    """One (sample, cout tile) step.

    xw_ref : (1, Cout_t, P_pad)  wide conv output (bf16)
    par_ref: (Cout_t, 3)         per-channel [scale, shift, prelu_alpha] (f32)
    o_ref  : (1, Cout_t, OH*OW)  compact, lane-dense output
    """
    scale = par_ref[:, 0:1]
    shift = par_ref[:, 1:2]
    alpha = par_ref[:, 2:3]

    def row(r):
        if sw == 1:
            xr = xw_ref[0, :, pl.ds(r * (sh * wp), ow)]
        else:
            xr = xw_ref[0, :, pl.ds(r * (sh * wp), ow, stride=sw)]
        y = xr.astype(jnp.float32) * scale + shift
        y = jnp.where(y >= 0.0, y, alpha * y)
        o_ref[0, :, pl.ds(r * ow, ow)] = y.astype(o_ref.dtype)

    if oh <= 64:
        for r in range(oh):           # small outputs: static unroll
            row(r)
    else:
        pl.loop(0, oh)(row)           # tall outputs: in-kernel loop


# --------------------------------- helpers ------------------------------------

def _round_up(x, m):
    return -(-x // m) * m


def _pick_spatial_tile(p, max_tile):
    """Whole wide sample if it fits, else the largest multiple of 128 <= max_tile
    that divides it, else max_tile (tail positions are mask-padded)."""
    if p <= max_tile:
        return p
    for cand in range(max_tile, 127, -128):
        if p % cand == 0:
            return cand
    return max_tile


def _vmem_limit(bytes_needed):
    """Scoped-VMEM limit derived from actual buffer sizes (32..100 MiB clamp)."""
    return int(min(100 << 20, max(32 << 20, int(bytes_needed * 1.5) + (4 << 20))))


# --------------------------------- wrapper ------------------------------------

def conv_forward(x, weight, *, stride, padding, dilation=(1, 1), groups=1,
                 bn_acti=False, bn_params=None, eps=1e-3,
                 mxu_dtype=jnp.bfloat16):
    """Equivalent of Conv(nIn, nOut, kSize, stride, padding, dilation, groups,
    bn_acti, bias=False).forward(x) with x in NCHW."""
    assert groups == 1  # TODO(synk): grouped convolution not implemented
    n, cin, h, w = x.shape
    cout, cin_w, kh, kw = weight.shape
    assert cin_w == cin
    sh, sw = stride
    ph, pw = padding
    dh, dw = dilation
    out_dtype = x.dtype

    hp, wp = h + 2 * ph, w + 2 * pw
    oh = (hp - dh * (kh - 1) - 1) // sh + 1
    ow = (wp - dw * (kw - 1) - 1) // sw + 1
    ohw_wide = hp - dh * (kh - 1)          # stride-1 "wide" output height
    p_wide = ohw_wide * wp                 # wide spatial positions per sample

    tap_offsets = tuple(ikh * dh * wp + ikw * dw
                        for ikh in range(kh) for ikw in range(kw))
    off_max = tap_offsets[-1]
    k_all = cin * kh * kw
    fold = k_all <= 256                    # single deep contraction vs per-tap

    # Cout tiling keeps the f32 accumulator register-resident for deep layers.
    if cout <= 128:
        cout_p, cout_t = _round_up(cout, 8), _round_up(cout, 8)
    else:
        cout_p, cout_t = _round_up(cout, 128), 128
    n_co = cout_p // cout_t

    # Spatial tile: cap so cout_t * t_p * 4B stays around half the vreg file.
    max_tile = max(128, min(2048, ((128 * 1024) // (4 * cout_t)) // 128 * 128))
    t_p = _pick_spatial_tile(p_wide, max_tile)
    n_sp = -(-p_wide // t_p)
    p_pad = n_sp * t_p
    l_in = p_pad + off_max                 # flattened sample length incl. tap reach
    single_tile = (n_sp == 1)

    wide_dtype = jnp.bfloat16 if bn_acti else out_dtype

    # --- cheap XLA prep: one ~1x copy of the input (NOT a 9x im2col slab) ----
    xf = jnp.pad(x, ((0, 0), (0, 0), (ph, ph), (pw, pw)))
    xf = xf.reshape(n, cin, hp * wp)
    xf = jnp.pad(xf, ((0, 0), (0, 0), (0, l_in - hp * wp))).astype(mxu_dtype)

    wf = weight.astype(jnp.float32)
    if cout_p != cout:
        wf = jnp.pad(wf, ((0, cout_p - cout), (0, 0), (0, 0), (0, 0)))
    if fold:
        # strip row order: tap-major, channel-minor -> (o, kh, kw, c) flatten
        w_in = jnp.transpose(wf, (0, 2, 3, 1)).reshape(cout_p, k_all).astype(mxu_dtype)
        w_spec = pl.BlockSpec((cout_t, k_all), lambda i, j, co: (co, 0))
        kern1 = functools.partial(_conv_fold_kernel, tap_offsets=tap_offsets,
                                  cin=cin, t_p=t_p, single_tile=single_tile)
        scratch = [pltpu.VMEM((k_all, t_p), mxu_dtype)]
    else:
        w_in = jnp.transpose(wf.reshape(cout_p, cin, kh * kw),
                             (2, 0, 1)).astype(mxu_dtype)
        w_spec = pl.BlockSpec((kh * kw, cout_t, cin), lambda i, j, co: (0, co, 0))
        kern1 = functools.partial(_conv_taps_kernel, tap_offsets=tap_offsets,
                                  t_p=t_p, single_tile=single_tile)
        scratch = []

    # validity mask over the wide spatial axis (static, tiny)
    pos = jnp.arange(p_pad, dtype=jnp.int32)
    col, row = pos % wp, pos // wp
    valid = ((pos < p_wide)
             & (col % sw == 0) & (col // sw < ow)
             & (row % sh == 0) & (row // sh < oh))
    mask = valid.astype(jnp.float32).reshape(1, p_pad)

    mxu_bytes = jnp.dtype(mxu_dtype).itemsize
    wide_bytes = jnp.dtype(wide_dtype).itemsize
    need1 = (2 * cin * l_in * mxu_bytes            # input window (dbl-buffered)
             + 2 * w_in.size * mxu_bytes           # weight slab
             + 2 * t_p * 4                         # mask tile
             + 2 * cout_t * t_p * wide_bytes       # wide output tile
             + 2 * cout_t * 128 * 4                # stats (lane-padded)
             + (k_all * t_p * mxu_bytes if fold else 0)   # strip scratch
             + cout_t * t_p * 4)                   # f32 accumulator head-room

    y_wide, stats = pl.pallas_call(
        kern1,
        out_shape=(jax.ShapeDtypeStruct((n, cout_p, p_pad), wide_dtype),
                   jax.ShapeDtypeStruct((n, n_sp, cout_p, 2), jnp.float32)),
        grid=(n, n_sp, n_co),
        in_specs=[
            pl.BlockSpec((1, cin, l_in), lambda i, j, co: (i, 0, 0)),
            w_spec,
            pl.BlockSpec((1, t_p), lambda i, j, co: (0, j)),
        ],
        out_specs=(
            pl.BlockSpec((1, cout_t, t_p), lambda i, j, co: (i, co, j)),
            pl.BlockSpec((1, 1, cout_t, 2), lambda i, j, co: (i, j, co, 0)),
        ),
        scratch_shapes=scratch,
        compiler_params=pltpu.CompilerParams(
            dimension_semantics=("parallel", "parallel", "arbitrary"),
            vmem_limit_bytes=_vmem_limit(need1)),
    )(xf, w_in, mask)

    if not bn_acti:
        # Pure conv: skip pass 2 entirely; one XLA slice of the wide layout.
        y4 = y_wide[:, :cout, :p_wide].reshape(n, cout, ohw_wide, wp)
        return y4[:, :, :(oh - 1) * sh + 1:sh, :(ow - 1) * sw + 1:sw]

    # --- BN(train) batch stats from the fused partial sums (tiny XLA math) ---
    gamma, beta, alpha = bn_params
    m_total = n * oh * ow
    tot = jnp.sum(stats[..., 0], axis=(0, 1))[:cout]
    tot_sq = jnp.sum(stats[..., 1], axis=(0, 1))[:cout]
    mean = tot / m_total
    var = jnp.maximum(tot_sq / m_total - mean * mean, 0.0)   # guard cancellation
    scale = gamma.astype(jnp.float32) / jnp.sqrt(var + eps)
    shift = beta.astype(jnp.float32) - mean * scale
    alpha_v = alpha.astype(jnp.float32)

    params = jnp.stack([scale, shift, alpha_v], axis=1)       # (cout, 3)
    if cout_p != cout:
        params = jnp.pad(params, ((0, cout_p - cout), (0, 0)))

    ohw = oh * ow
    kern2 = functools.partial(_bn_prelu_kernel, oh=oh, ow=ow, wp=wp, sh=sh, sw=sw)
    need2 = (2 * cout_t * p_pad * wide_bytes
             + 2 * cout_t * 128 * 4
             + 2 * cout_t * _round_up(ohw, 128) * 4)

    out_flat = pl.pallas_call(
        kern2,
        out_shape=jax.ShapeDtypeStruct((n, cout_p, ohw), out_dtype),
        grid=(n, n_co),
        in_specs=[
            pl.BlockSpec((1, cout_t, p_pad), lambda i, co: (i, co, 0)),
            pl.BlockSpec((cout_t, 3), lambda i, co: (co, 0)),
        ],
        out_specs=pl.BlockSpec((1, cout_t, ohw), lambda i, co: (i, co, 0)),
        compiler_params=pltpu.CompilerParams(
            dimension_semantics=("parallel", "parallel"),
            vmem_limit_bytes=_vmem_limit(need2)),
    )(y_wide, params)

    out = out_flat.reshape(n, cout_p, oh, ow)
    if cout_p != cout:
        out = out[:, :cout]
    return out                                               # NCHW


# ----------------------------------- main ------------------------------------

if __name__ == "__main__":
    # Conv(nIn=4, nOut=8, kSize=3, stride=1, padding=1, dilation=(1,1),
    #      groups=1, bn_acti=True, bias=False)
    N, Cin, H, W = 2, 4, 16, 16
    Cout, K = 8, 3
    stride, padding, dilation = (1, 1), (1, 1), (1, 1)

    key = jax.random.PRNGKey(0)
    kx, kw0, kg, kb = jax.random.split(key, 4)
    x = jax.random.normal(kx, (N, Cin, H, W), dtype=jnp.float32)
    weight = jax.random.normal(kw0, (Cout, Cin, K, K), dtype=jnp.float32) * 0.1
    gamma = 1.0 + 0.1 * jax.random.normal(kg, (Cout,), dtype=jnp.float32)
    beta = 0.1 * jax.random.normal(kb, (Cout,), dtype=jnp.float32)
    alpha = jnp.full((Cout,), 0.25, dtype=jnp.float32)        # PReLU default init

    out = conv_forward(x, weight, stride=stride, padding=padding,
                       dilation=dilation, groups=1, bn_acti=True,
                       bn_params=(gamma, beta, alpha))
    out = jax.block_until_ready(out)

    # Reference: XLA f32 conv + BatchNorm (training-mode batch stats) + PReLU.
    ref = jax.lax.conv_general_dilated(
        x, weight, window_strides=stride,
        padding=[(padding[0], padding[0]), (padding[1], padding[1])],
        rhs_dilation=dilation,
        dimension_numbers=("NCHW", "OIHW", "NCHW"))
    mean = jnp.mean(ref, axis=(0, 2, 3), keepdims=True)
    var = jnp.mean(jnp.square(ref - mean), axis=(0, 2, 3), keepdims=True)
    ref_bn = (ref - mean) / jnp.sqrt(var + 1e-3) * gamma[None, :, None, None] \
             + beta[None, :, None, None]
    ref_out = jnp.where(ref_bn >= 0, ref_bn, alpha[None, :, None, None] * ref_bn)

    assert out.shape == (N, Cout, H, W)
    # bf16 MXU operands -> tolerance loosened vs the f32 XLA reference.
    err = float(jnp.max(jnp.abs(out - ref_out)))
    assert jnp.allclose(out, ref_out, rtol=3e-2, atol=3e-2), f"max err {err}"

    # Also check the bn_acti=False path (pure convolution, no pass 2).
    out_conv = jax.block_until_ready(
        conv_forward(x, weight, stride=stride, padding=padding,
                     dilation=dilation, groups=1, bn_acti=False))
    assert out_conv.shape == ref.shape
    err2 = float(jnp.max(jnp.abs(out_conv - ref)))
    assert jnp.allclose(out_conv, ref, rtol=3e-2, atol=3e-2), f"max err {err2}"

    print("KERNEL_OK")
</pallas_src>

<mosaic_0001>
module attributes {stable_mosaic.version = 11 : i64} {
  func.func @_conv_fold_kernel(%arg0: i32, %arg1: i32, %arg2: i32, %arg3: memref<1x4x326xbf16, #tpu.memory_space<vmem>>, %arg4: memref<8x36xbf16, #tpu.memory_space<vmem>>, %arg5: memref<1x288xf32, #tpu.memory_space<vmem>>, %arg6: memref<1x8x288xbf16, #tpu.memory_space<vmem>>, %arg7: memref<1x1x8x2xf32, #tpu.memory_space<vmem>>, %arg8: memref<36x288xbf16, #tpu.memory_space<vmem>>) attributes {dimension_semantics = [#tpu.dimension_semantics<parallel>, #tpu.dimension_semantics<parallel>, #tpu.dimension_semantics<arbitrary>], iteration_bounds = array<i64: 2, 1, 1>, scalar_prefetch = 0 : i64, scratch_operands = 1 : i64, tpu.core_type = #tpu.core_type<tc>, window_params = [{transform_indices = @transform_0, window_bounds = array<i64: 1, 4, 326>}, {transform_indices = @transform_1, window_bounds = array<i64: 8, 36>}, {transform_indices = @transform_2, window_bounds = array<i64: 1, 288>}, {transform_indices = @transform_3, window_bounds = array<i64: 1, 8, 288>}, {transform_indices = @transform_4, window_bounds = array<i64: 1, 1, 8, 2>}]} {
    %c0_i32 = arith.constant 0 : i32
    %0 = arith.cmpi eq, %arg2, %c0_i32 : i32
    %1 = arith.extui %0 : i1 to i32
    %c0_i32_0 = arith.constant 0 : i32
    %2 = arith.cmpi ne, %1, %c0_i32_0 : i32
    scf.if %2 {
      %c0_18 = arith.constant 0 : index
      %c0_19 = arith.constant 0 : index
      %c0_20 = arith.constant 0 : index
      %24 = vector.load %arg3[%c0_18, %c0_19, %c0_20] : memref<1x4x326xbf16, #tpu.memory_space<vmem>>, vector<1x4x288xbf16>
      %25 = vector.shape_cast %24 : vector<1x4x288xbf16> to vector<4x288xbf16>
      %c0_21 = arith.constant 0 : index
      %c0_22 = arith.constant 0 : index
      %26 = vector.load %arg8[%c0_21, %c0_22] : memref<36x288xbf16, #tpu.memory_space<vmem>>, vector<4x288xbf16>
      tpu.vector_store %arg8[%c0_21, %c0_22], %25 {strides = array<i32>} : memref<36x288xbf16, #tpu.memory_space<vmem>>, vector<4x288xbf16>,
      %c0_23 = arith.constant 0 : index
      %c0_24 = arith.constant 0 : index
      %c1_25 = arith.constant 1 : index
      %27 = vector.load %arg3[%c0_23, %c0_24, %c1_25] : memref<1x4x326xbf16, #tpu.memory_space<vmem>>, vector<1x4x288xbf16>
      %28 = vector.shape_cast %27 : vector<1x4x288xbf16> to vector<4x288xbf16>
      %c4 = arith.constant 4 : index
      %c0_26 = arith.constant 0 : index
      %29 = vector.load %arg8[%c4, %c0_26] : memref<36x288xbf16, #tpu.memory_space<vmem>>, vector<4x288xbf16>
      tpu.vector_store %arg8[%c4, %c0_26], %28 {strides = array<i32>} : memref<36x288xbf16, #tpu.memory_space<vmem>>, vector<4x288xbf16>,
      %c0_27 = arith.constant 0 : index
      %c0_28 = arith.constant 0 : index
      %c2 = arith.constant 2 : index
      %30 = vector.load %arg3[%c0_27, %c0_28, %c2] : memref<1x4x326xbf16, #tpu.memory_space<vmem>>, vector<1x4x288xbf16>
      %31 = vector.shape_cast %30 : vector<1x4x288xbf16> to vector<4x288xbf16>
      %c8 = arith.constant 8 : index
      %c0_29 = arith.constant 0 : index
      %32 = vector.load %arg8[%c8, %c0_29] : memref<36x288xbf16, #tpu.memory_space<vmem>>, vector<4x288xbf16>
      tpu.vector_store %arg8[%c8, %c0_29], %31 {strides = array<i32>} : memref<36x288xbf16, #tpu.memory_space<vmem>>, vector<4x288xbf16>,
      %c0_30 = arith.constant 0 : index
      %c0_31 = arith.constant 0 : index
      %c18 = arith.constant 18 : index
      %33 = vector.load %arg3[%c0_30, %c0_31, %c18] : memref<1x4x326xbf16, #tpu.memory_space<vmem>>, vector<1x4x288xbf16>
      %34 = vector.shape_cast %33 : vector<1x4x288xbf16> to vector<4x288xbf16>
      %c12 = arith.constant 12 : index
      %c0_32 = arith.constant 0 : index
      %35 = vector.load %arg8[%c12, %c0_32] : memref<36x288xbf16, #tpu.memory_space<vmem>>, vector<4x288xbf16>
      tpu.vector_store %arg8[%c12, %c0_32], %34 {strides = array<i32>} : memref<36x288xbf16, #tpu.memory_space<vmem>>, vector<4x288xbf16>,
      %c0_33 = arith.constant 0 : index
      %c0_34 = arith.constant 0 : index
      %c19 = arith.constant 19 : index
      %36 = vector.load %arg3[%c0_33, %c0_34, %c19] : memref<1x4x326xbf16, #tpu.memory_space<vmem>>, vector<1x4x288xbf16>
      %37 = vector.shape_cast %36 : vector<1x4x288xbf16> to vector<4x288xbf16>
      %c16 = arith.constant 16 : index
      %c0_35 = arith.constant 0 : index
      %38 = vector.load %arg8[%c16, %c0_35] : memref<36x288xbf16, #tpu.memory_space<vmem>>, vector<4x288xbf16>
      tpu.vector_store %arg8[%c16, %c0_35], %37 {strides = array<i32>} : memref<36x288xbf16, #tpu.memory_space<vmem>>, vector<4x288xbf16>,
      %c0_36 = arith.constant 0 : index
      %c0_37 = arith.constant 0 : index
      %c20 = arith.constant 20 : index
      %39 = vector.load %arg3[%c0_36, %c0_37, %c20] : memref<1x4x326xbf16, #tpu.memory_space<vmem>>, vector<1x4x288xbf16>
      %40 = vector.shape_cast %39 : vector<1x4x288xbf16> to vector<4x288xbf16>
      %c20_38 = arith.constant 20 : index
      %c0_39 = arith.constant 0 : index
      %41 = vector.load %arg8[%c20_38, %c0_39] : memref<36x288xbf16, #tpu.memory_space<vmem>>, vector<4x288xbf16>
      tpu.vector_store %arg8[%c20_38, %c0_39], %40 {strides = array<i32>} : memref<36x288xbf16, #tpu.memory_space<vmem>>, vector<4x288xbf16>,
      %c0_40 = arith.constant 0 : index
      %c0_41 = arith.constant 0 : index
      %c36 = arith.constant 36 : index
      %42 = vector.load %arg3[%c0_40, %c0_41, %c36] : memref<1x4x326xbf16, #tpu.memory_space<vmem>>, vector<1x4x288xbf16>
      %43 = vector.shape_cast %42 : vector<1x4x288xbf16> to vector<4x288xbf16>
      %c24 = arith.constant 24 : index
      %c0_42 = arith.constant 0 : index
      %44 = vector.load %arg8[%c24, %c0_42] : memref<36x288xbf16, #tpu.memory_space<vmem>>, vector<4x288xbf16>
      tpu.vector_store %arg8[%c24, %c0_42], %43 {strides = array<i32>} : memref<36x288xbf16, #tpu.memory_space<vmem>>, vector<4x288xbf16>,
      %c0_43 = arith.constant 0 : index
      %c0_44 = arith.constant 0 : index
      %c37 = arith.constant 37 : index
      %45 = vector.load %arg3[%c0_43, %c0_44, %c37] : memref<1x4x326xbf16, #tpu.memory_space<vmem>>, vector<1x4x288xbf16>
      %46 = vector.shape_cast %45 : vector<1x4x288xbf16> to vector<4x288xbf16>
      %c28 = arith.constant 28 : index
      %c0_45 = arith.constant 0 : index
      %47 = vector.load %arg8[%c28, %c0_45] : memref<36x288xbf16, #tpu.memory_space<vmem>>, vector<4x288xbf16>
      tpu.vector_store %arg8[%c28, %c0_45], %46 {strides = array<i32>} : memref<36x288xbf16, #tpu.memory_space<vmem>>, vector<4x288xbf16>,
      %c0_46 = arith.constant 0 : index
      %c0_47 = arith.constant 0 : index
      %c38 = arith.constant 38 : index
      %48 = vector.load %arg3[%c0_46, %c0_47, %c38] : memref<1x4x326xbf16, #tpu.memory_space<vmem>>, vector<1x4x288xbf16>
      %49 = vector.shape_cast %48 : vector<1x4x288xbf16> to vector<4x288xbf16>
      %c32 = arith.constant 32 : index
      %c0_48 = arith.constant 0 : index
      %50 = vector.load %arg8[%c32, %c0_48] : memref<36x288xbf16, #tpu.memory_space<vmem>>, vector<4x288xbf16>
      tpu.vector_store %arg8[%c32, %c0_48], %49 {strides = array<i32>} : memref<36x288xbf16, #tpu.memory_space<vmem>>, vector<4x288xbf16>,
    } else {
    }
    %c0 = arith.constant 0 : index
    %c0_1 = arith.constant 0 : index
    %3 = vector.load %arg4[%c0, %c0_1] : memref<8x36xbf16, #tpu.memory_space<vmem>>, vector<8x36xbf16>
    %c0_2 = arith.constant 0 : index
    %c0_3 = arith.constant 0 : index
    %4 = vector.load %arg8[%c0_2, %c0_3] : memref<36x288xbf16, #tpu.memory_space<vmem>>, vector<36x288xbf16>
    %cst = arith.constant dense<0.000000e+00> : vector<8x288xf32>
    %5 = tpu.matmul %3, %4, %cst {dimension_numbers = #tpu.dot_dimension_numbers<[1], [0], [0], [1], [0, 0, 1, 1], [], []>} : vector<8x36xbf16>, vector<36x288xbf16>, vector<8x288xf32> -> vector<8x288xf32>
    %6 = arith.truncf %5 : vector<8x288xf32> to vector<8x288xbf16>
    %c0_4 = arith.constant 0 : index
    %c0_5 = arith.constant 0 : index
    %c0_6 = arith.constant 0 : index
    %7 = vector.load %arg6[%c0_4, %c0_5, %c0_6] : memref<1x8x288xbf16, #tpu.memory_space<vmem>>, vector<1x8x288xbf16>
    %8 = vector.shape_cast %7 : vector<1x8x288xbf16> to vector<8x288xbf16>
    %9 = vector.shape_cast %6 : vector<8x288xbf16> to vector<1x8x288xbf16>
    tpu.vector_store %arg6[%c0_4, %c0_5, %c0_6], %9 {strides = array<i32>} : memref<1x8x288xbf16, #tpu.memory_space<vmem>>, vector<1x8x288xbf16>,
    %c0_7 = arith.constant 0 : index
    %c0_8 = arith.constant 0 : index
    %10 = vector.load %arg5[%c0_7, %c0_8] : memref<1x288xf32, #tpu.memory_space<vmem>>, vector<1x288xf32>
    %11 = vector.broadcast %10 : vector<1x288xf32> to vector<8x288xf32>
    %12 = arith.mulf %5, %11 : vector<8x288xf32>
    %cst_9 = arith.constant dense<0.000000e+00> : vector<8xf32>
    %13 = vector.multi_reduction <add>, %12, %cst_9 [1] : vector<8x288xf32> to vector<8xf32>
    %14 = vector.shape_cast %13 : vector<8xf32> to vector<8x1xf32>
    %c0_10 = arith.constant 0 : index
    %c0_11 = arith.constant 0 : index
    %c0_12 = arith.constant 0 : index
    %c0_13 = arith.constant 0 : index
    %15 = vector.load %arg7[%c0_10, %c0_11, %c0_12, %c0_13] : memref<1x1x8x2xf32, #tpu.memory_space<vmem>>, vector<1x1x8x1xf32>
    %16 = vector.shape_cast %15 : vector<1x1x8x1xf32> to vector<8x1xf32>
    %17 = vector.shape_cast %14 : vector<8x1xf32> to vector<1x1x8x1xf32>
    tpu.vector_store %arg7[%c0_10, %c0_11, %c0_12, %c0_13], %17 {strides = array<i32>} : memref<1x1x8x2xf32, #tpu.memory_space<vmem>>, vector<1x1x8x1xf32>,
    %18 = arith.mulf %12, %5 : vector<8x288xf32>
    %cst_14 = arith.constant dense<0.000000e+00> : vector<8xf32>
    %19 = vector.multi_reduction <add>, %18, %cst_14 [1] : vector<8x288xf32> to vector<8xf32>
    %20 = vector.shape_cast %19 : vector<8xf32> to vector<8x1xf32>
    %c0_15 = arith.constant 0 : index
    %c0_16 = arith.constant 0 : index
    %c0_17 = arith.constant 0 : index
    %c1 = arith.constant 1 : index
    %21 = vector.load %arg7[%c0_15, %c0_16, %c0_17, %c1] : memref<1x1x8x2xf32, #tpu.memory_space<vmem>>, vector<1x1x8x1xf32>
    %22 = vector.shape_cast %21 : vector<1x1x8x1xf32> to vector<8x1xf32>
    %23 = vector.shape_cast %20 : vector<8x1xf32> to vector<1x1x8x1xf32>
    tpu.vector_store %arg7[%c0_15, %c0_16, %c0_17, %c1], %23 {strides = array<i32>} : memref<1x1x8x2xf32, #tpu.memory_space<vmem>>, vector<1x1x8x1xf32>,
    return
  }
  func.func @transform_0(%arg0: i32, %arg1: i32, %arg2: i32) -> (i32, i32, i32) {
    %c0_i32 = arith.constant 0 : i32
    %c0_i32_0 = arith.constant 0 : i32
    %c0_i32_1 = arith.constant 0 : i32
    return %arg0, %c0_i32, %c0_i32_0 : i32, i32, i32
  }
  func.func @transform_1(%arg0: i32, %arg1: i32, %arg2: i32) -> (i32, i32) {
    %c0_i32 = arith.constant 0 : i32
    %c0_i32_0 = arith.constant 0 : i32
    return %arg2, %c0_i32 : i32, i32
  }
  func.func @transform_2(%arg0: i32, %arg1: i32, %arg2: i32) -> (i32, i32) {
    %c0_i32 = arith.constant 0 : i32
    %c0_i32_0 = arith.constant 0 : i32
    return %c0_i32, %arg1 : i32, i32
  }
  func.func @transform_3(%arg0: i32, %arg1: i32, %arg2: i32) -> (i32, i32, i32) {
    %c0_i32 = arith.constant 0 : i32
    return %arg0, %arg2, %arg1 : i32, i32, i32
  }
  func.func @transform_4(%arg0: i32, %arg1: i32, %arg2: i32) -> (i32, i32, i32, i32) {
    %c0_i32 = arith.constant 0 : i32
    %c0_i32_0 = arith.constant 0 : i32
    return %arg0, %arg1, %arg2, %c0_i32 : i32, i32, i32, i32
  }
}

</mosaic_0001>

<llo_original>
// kernel: tpu_custom_call.1
$region0: #{tpu_custom_call.1}
  #allocation0 [shape = 'u32[]', space=smem, size = 0x4, offset = 0x4, fixed_abs, tag = 'smem constant byte address 0x4 - core index']
  #allocation1 [shape = 'u32[144,128]{1,0:T(1,128)}', space=vmem, size = 0x12000, scoped, tag = 'internal scratch']
  #allocation2 [shape = 'bf16[36,288]{1,0:T(8,128)(2,1)}', space=vmem, size = 0x7800, scoped, tag = 'scratch operand']
  %s0 = inlined_call_operand.hbm [shape: bf16[2,4,326], index: 0, kind: input, shape index: {}]
  %s1 = inlined_call_operand.hbm [shape: bf16[8,36], index: 1, kind: input, shape index: {}]
  %s2 = inlined_call_operand.vmem [shape: f32[1,288], index: 2, kind: input, shape index: {}]
  %s3 = inlined_call_operand.hbm [shape: bf16[2,8,288], index: 3, kind: output, shape index: {0}]
  %s4 = inlined_call_operand.vmem [shape: f32[2,1,8,2], index: 4, kind: output, shape index: {1}]
  %5 = xla_tuple %s3, %s4
  %s6 = sld [smem:[#allocation0]]
  $region65: #{tpu_custom_call.1} parent=0
    _
  %s8 = ssub.s32 1, %s6
  %s9 = scalar_select 0, %s8, %s6
  $region1: #{tpu_custom_call.1} parent=0
    #allocation3 [shape = 'u8[6144]{0}', space=vmem, size = 0x1800, scoped, tag = 'input window, operand 0']
    #allocation4 [shape = 's32[2]{0}', space=sflag, size = 0x8, scoped, tag = 'scoped memory for tpu_custom_call.1']
    #allocation5 [shape = 's32[2]{0}', space=sflag, size = 0x8, scoped, tag = 'scoped memory for tpu_custom_call.1']
    #allocation6 [shape = 'u8[2048]{0}', space=vmem, size = 0x800, scoped, tag = 'input window, operand 1, single buffered']
    #allocation7 [shape = 's32[1]{0}', space=sflag, size = 0x4, scoped, tag = 'scoped memory for tpu_custom_call.1']
    #allocation8 [shape = 'u8[12288]{0}', space=vmem, size = 0x3000, scoped, tag = 'output window, operand 0']
    %10 = vsyncpa [#allocation4], 0
    %s11 = scalar_lea.sflag [#allocation4], 1
    %12 = vsyncpa %s11, 0
    %13 = vsyncpa [#allocation7], 0
    %14 = vsyncpa [#allocation5], 0
    %s15 = scalar_lea.sflag [#allocation5], 1
    %16 = vsyncpa %s15, 0
    loop: start=0, step=1, limit=4
    $region2: #{tpu_custom_call.1} parent=1 // loop_pre_header
      _
    $region3: #{tpu_custom_call.1} parent=1 // loop_header
      %s18 = sphi 0, %s22
      %p19 = scmp.ge.s32.totalorder %s18, 4
      %s25 = sphi 0, %s44
      %s26 = sphi 0, %s40
      %s27 = sphi 0, %s36
      %s28 = sphi 0, %s25
      %s29 = sphi 0, %s26
      %s30 = sphi 0, %s27
      %s31 = sphi 0, %s28
      %s32 = sphi 0, %s29
      %s33 = sphi 0, %s30
      %s47 = sphi 0, %s49
      %s50 = sphi 0, %s47
      %s51 = sphi 0, %s50
      %s67 = sphi 0, %s51
      %s73 = sphi 0, %s75
      %s76 = sphi 0, %s73
      %s77 = sphi 0, %s76
      %s93 = sphi 0, %s77
      %s99 = sphi 0, %s101
      %s102 = sphi 0, %s99
      %s103 = sphi 0, %s102
      %s119 = sphi 0, %s103
      %s129 = sphi 0, %s131
      %s132 = sphi 0, %s129
      %s133 = sphi 0, %s132
      %s149 = sphi 0, %s133
      %s159 = sphi 0, %s161
      %s162 = sphi 0, %s159
      %s163 = sphi 0, %s162
      %s179 = sphi 0, %s163
    $region4: #{tpu_custom_call.1} parent=1 // loop_header_branch
      %21 = sbr.rel (%p19) target = $region8
    $region5: #{tpu_custom_call.1} parent=1 // loop_body
      %s23 = ssub.s32 %s18, 1
      %s24 = ssub.s32 %s18, 2
      %s34 = sadd.s32 1, %s27
      %p35 = scmp.ge.s32.totalorder %s34, 1
      %s36 = scalar_select %p35, 0, %s34
      %s37 = sadd.s32 1, %s26
      %s38 = scalar_select %p35, %s37, %s26
      %p39 = scmp.ge.s32.totalorder %s38, 1
      %s40 = scalar_select %p39, 0, %s38
      %s41 = sadd.s32 1, %s25
      %s42 = scalar_select %p39, %s41, %s25
      %p43 = scmp.ge.s32.totalorder %s42, 2
      %s44 = scalar_select %p43, 0, %s42
      %s45 = ssub.s32 %s25, %s44
      %p46 = scmp.eq.s32.totalorder %s45, 0
      %s48 = sadd.s32 %s47, 1
      %s49 = scalar_select %p46, %s47, %s48
      %p52 = pneg %p46
      %p53 = scmp.eq.s32.totalorder %s18, 1
      %p54 = por %p52, %p53
      %p55 = scmp.ne.s32.totalorder %s47, %s50
      %p56 = scmp.eq.s32.totalorder %s18, 0
      %p57 = por %p55, %p56
      %p58 = scmp.ne.s32.totalorder %s47, %s50
      %p59 = scmp.eq.s32.totalorder %s23, 1
      %p60 = por %p58, %p59
      %p61 = scmp.ne.s32.totalorder %s50, %s51
      %p62 = scmp.eq.s32.totalorder %s23, 0
      %p63 = por %p61, %p62
      %p64 = scmp.ne.s32.totalorder %s50, %s51
      %p65 = scmp.eq.s32.totalorder %s24, 1
      %p66 = por %p64, %p65
      %p68 = scmp.ne.s32.totalorder %s51, %s67
      %p69 = scmp.eq.s32.totalorder %s24, 0
      %p70 = por %p68, %p69
      %s71 = ssub.s32 %s27, %s36
      %p72 = scmp.eq.s32.totalorder %s71, 0
      %s74 = sadd.s32 %s73, 1
      %s75 = scalar_select %p72, %s73, %s74
      %p78 = pneg %p72
      %p79 = scmp.eq.s32.totalorder %s18, 1
      %p80 = por %p78, %p79
      %p81 = scmp.ne.s32.totalorder %s73, %s76
      %p82 = scmp.eq.s32.totalorder %s18, 0
      %p83 = por %p81, %p82
      %p84 = scmp.ne.s32.totalorder %s73, %s76
      %p85 = scmp.eq.s32.totalorder %s23, 1
      %p86 = por %p84, %p85
      %p87 = scmp.ne.s32.totalorder %s76, %s77
      %p88 = scmp.eq.s32.totalorder %s23, 0
      %p89 = por %p87, %p88
      %p90 = scmp.ne.s32.totalorder %s76, %s77
      %p91 = scmp.eq.s32.totalorder %s24, 1
      %p92 = por %p90, %p91
      %p94 = scmp.ne.s32.totalorder %s77, %s93
      %p95 = scmp.eq.s32.totalorder %s24, 0
      %p96 = por %p94, %p95
      %s97 = ssub.s32 %s26, %s40
      %p98 = scmp.eq.s32.totalorder %s97, 0
      %s100 = sadd.s32 %s99, 1
      %s101 = scalar_select %p98, %s99, %s100
      %p104 = pneg %p98
      %p105 = scmp.eq.s32.totalorder %s18, 1
      %p106 = por %p104, %p105
      %p107 = scmp.ne.s32.totalorder %s99, %s102
      %p108 = scmp.eq.s32.totalorder %s18, 0
      %p109 = por %p107, %p108
      %p110 = scmp.ne.s32.totalorder %s99, %s102
      %p111 = scmp.eq.s32.totalorder %s23, 1
      %p112 = por %p110, %p111
      %p113 = scmp.ne.s32.totalorder %s102, %s103
      %p114 = scmp.eq.s32.totalorder %s23, 0
      %p115 = por %p113, %p114
      %p116 = scmp.ne.s32.totalorder %s102, %s103
      %p117 = scmp.eq.s32.totalorder %s24, 1
      %p118 = por %p116, %p117
      %p120 = scmp.ne.s32.totalorder %s103, %s119
      %p121 = scmp.eq.s32.totalorder %s24, 0
      %p122 = por %p120, %p121
      %s123 = ssub.s32 %s25, %s44
      %s124 = ssub.s32 %s27, %s36
      %s125 = sor.u32 %s123, %s124
      %s126 = ssub.s32 %s26, %s40
      %s127 = sor.u32 %s125, %s126
      %p128 = scmp.eq.s32.totalorder %s127, 0
      %s130 = sadd.s32 %s129, 1
      %s131 = scalar_select %p128, %s129, %s130
      %p134 = pneg %p128
      %p135 = scmp.eq.s32.totalorder %s18, 1
      %p136 = por %p134, %p135
      %p137 = scmp.ne.s32.totalorder %s129, %s132
      %p138 = scmp.eq.s32.totalorder %s18, 0
      %p139 = por %p137, %p138
      %p140 = scmp.ne.s32.totalorder %s129, %s132
      %p141 = scmp.eq.s32.totalorder %s23, 1
      %p142 = por %p140, %p141
      %p143 = scmp.ne.s32.totalorder %s132, %s133
      %p144 = scmp.eq.s32.totalorder %s23, 0
      %p145 = por %p143, %p144
      %p146 = scmp.ne.s32.totalorder %s132, %s133
      %p147 = scmp.eq.s32.totalorder %s24, 1
      %p148 = por %p146, %p147
      %p150 = scmp.ne.s32.totalorder %s133, %s149
      %p151 = scmp.eq.s32.totalorder %s24, 0
      %p152 = por %p150, %p151
      %s153 = ssub.s32 %s25, %s44
      %s154 = ssub.s32 %s26, %s40
      %s155 = sor.u32 %s153, %s154
      %s156 = ssub.s32 %s27, %s36
      %s157 = sor.u32 %s155, %s156
      %p158 = scmp.eq.s32.totalorder %s157, 0
      %s160 = sadd.s32 %s159, 1
      %s161 = scalar_select %p158, %s159, %s160
      %p164 = pneg %p158
      %p165 = scmp.eq.s32.totalorder %s18, 1
      %p166 = por %p164, %p165
      %p167 = scmp.ne.s32.totalorder %s159, %s162
      %p168 = scmp.eq.s32.totalorder %s18, 0
      %p169 = por %p167, %p168
      %p170 = scmp.ne.s32.totalorder %s159, %s162
      %p171 = scmp.eq.s32.totalorder %s23, 1
      %p172 = por %p170, %p171
      %p173 = scmp.ne.s32.totalorder %s162, %s163
      %p174 = scmp.eq.s32.totalorder %s23, 0
      %p175 = por %p173, %p174
      %p176 = scmp.ne.s32.totalorder %s162, %s163
      %p177 = scmp.eq.s32.totalorder %s24, 1
      %p178 = por %p176, %p177
      %p180 = scmp.ne.s32.totalorder %s163, %s179
      %p181 = scmp.eq.s32.totalorder %s24, 0
      %p182 = por %p180, %p181
      %p183 = scmp.le.s32.totalorder 1, %s18
      %p184 = scmp.lt.s32.totalorder %s18, 3
      %p185 = pnand %p183, %p184
      %p186 = pneg %p185
      // Predicated region
      $region9: #{tpu_custom_call.1} parent=5 // pred_check
        _
      $region10: #{tpu_custom_call.1} parent=5 // pred_check_branch
        %188 = sbr.rel (%p185) target = $region12
      $region11: #{tpu_custom_call.1} parent=5 // pred_region
        %s189 = ssub.s32 %s18, 1
        // Predicated region
        $region13: #{tpu_custom_call.1} parent=11 // pred_check
          %p190 = pneg %p89
        $region14: #{tpu_custom_call.1} parent=11 // pred_check_branch
          %192 = sbr.rel (%p190) target = $region16
        $region15: #{tpu_custom_call.1} parent=11 // pred_region
          %s194 = ssub.s32 64, 64
          %195 = vsyncadd [#allocation7], %s194
          %s196 = smul.addr %s30, 64
          %s197 = scalar_lea.hbm %s1, %s196
          %s199 = sshll.u32 [#allocation6], 4
          %s200 = int_to_ptr.vmem [resolvable:$true] %s199
          %202 = dma.hbm_to_vmem [thread:$0]  %s197, 64, %s200, [#allocation7]
        $region16: #{tpu_custom_call.1} parent=11 // pred_fallthru
          _
        // Predicated region
        $region17: #{tpu_custom_call.1} parent=11 // pred_check
          %p203 = pneg %p115
        $region18: #{tpu_custom_call.1} parent=11 // pred_check_branch
          %205 = sbr.rel (%p203) target = $region20
        $region19: #{tpu_custom_call.1} parent=11 // pred_region
          %s206 = smul.u32 3, %s29
          %p207 = scmp.lt.s32.totalorder %s206, 2
          %s208 = scalar_select %p207, %s206, 2
          %s209 = scalar_lea.vmem %s2, %s208
          %s210 = smul.u32 3, %s29
        $region20: #{tpu_custom_call.1} parent=11 // pred_fallthru
          _
      $region12: #{tpu_custom_call.1} parent=5 // pred_fallthru
        _
      %p211 = scmp.lt.s32.totalorder %s18, 2
      // Predicated region
      $region21: #{tpu_custom_call.1} parent=5 // pred_check
        %p212 = pneg %p211
      $region22: #{tpu_custom_call.1} parent=5 // pred_check_branch
        %214 = sbr.rel (%p212) target = $region24
      $region23: #{tpu_custom_call.1} parent=5 // pred_region
        // Predicated region
        $region25: #{tpu_custom_call.1} parent=23 // pred_check
          %p215 = pneg %p57
        $region26: #{tpu_custom_call.1} parent=23 // pred_check_branch
          %217 = sbr.rel (%p215) target = $region28
        $region27: #{tpu_custom_call.1} parent=23 // pred_region
          %s218 = sand.u32 %s47, 1
          %s219 = scalar_lea.sflag [#allocation4], %s218
          %s220 = sand.u32 %s47, 1
          %s221 = smul.addr %s220, 6
          %s222 = scalar_lea.vmem [#allocation3], %s221
          %s224 = ssub.s32 96, 96
          %225 = vsyncadd %s219, %s224
          %s226 = smul.addr %s25, 3
          %s227 = smul.addr %s226, 32
          %s228 = scalar_lea.hbm %s0, %s227
          %s230 = sshll.u32 %s222, 4
          %s231 = int_to_ptr.vmem [resolvable:$true] %s230
          %233 = dma.hbm_to_vmem [thread:$0]  %s228, 96, %s231, %s219
        $region28: #{tpu_custom_call.1} parent=23 // pred_fallthru
          _
      $region24: #{tpu_custom_call.1} parent=5 // pred_fallthru
        _
      %p234 = scmp.le.s32.totalorder 1, %s18
      %p235 = scmp.lt.s32.totalorder %s18, 3
      %p236 = pnand %p234, %p235
      %p237 = pneg %p236
      // Predicated region
      $region29: #{tpu_custom_call.1} parent=5 // pred_check
        _
      $region30: #{tpu_custom_call.1} parent=5 // pred_check_branch
        %239 = sbr.rel (%p236) target = $region32
      $region31: #{tpu_custom_call.1} parent=5 // pred_region
        %s240 = ssub.s32 %s18, 1
        %s241 = sand.u32 %s50, 1
        %s242 = scalar_lea.sflag [#allocation4], %s241
        %s243 = sand.u32 %s50, 1
        %s244 = smul.addr %s243, 6
        %s245 = scalar_lea.vmem [#allocation3], %s244
        // Predicated region
        $region33: #{tpu_custom_call.1} parent=31 // pred_check
          %p246 = pneg %p63
        $region34: #{tpu_custom_call.1} parent=31 // pred_check_branch
          %248 = sbr.rel (%p246) target = $region36
        $region35: #{tpu_custom_call.1} parent=31 // pred_region
          %249 = dma.done %s242, 96
        $region36: #{tpu_custom_call.1} parent=31 // pred_fallthru
          _
        // Predicated region
        $region37: #{tpu_custom_call.1} parent=31 // pred_check
          %p250 = pneg %p89
        $region38: #{tpu_custom_call.1} parent=31 // pred_check_branch
          %252 = sbr.rel (%p250) target = $region40
        $region39: #{tpu_custom_call.1} parent=31 // pred_region
          %253 = dma.done [#allocation7], 64
        $region40: #{tpu_custom_call.1} parent=31 // pred_fallthru
          _
        %s254 = sand.u32 %s50, 1
        %s255 = scalar_lea.sflag [#allocation4], %s254
        %s256 = sand.u32 %s50, 1
        %s257 = smul.addr %s256, 6
        %s258 = scalar_lea.vmem [#allocation3], %s257
        %p259 = pneg %p63
        %p260 = pneg %p60
        %p261 = pneg %p89
        %p262 = pneg %p86
        %s263 = smul.u32 3, %s29
        %p264 = scmp.lt.s32.totalorder %s263, 2
        %s265 = scalar_select %p264, %s263, 2
        %s266 = scalar_lea.vmem %s2, %s265
        %p267 = pneg %p115
        %p268 = pneg %p112
        %p269 = pneg %p145
        %p270 = pneg %p142
        %s271 = sand.u32 %s132, 1
        %s272 = scalar_lea.sflag [#allocation5], %s271
        %s273 = sand.u32 %s132, 1
        %s274 = smul.addr %s273, 12
        %s275 = scalar_lea.vmem [#allocation8], %s274
        %p276 = pneg %p175
        %p277 = pneg %p172
        %p278 = scmp.lt.s32.totalorder %s28, 1
        %s279 = scalar_select %p278, %s28, 1
        %p280 = scmp.lt.s32.totalorder %s29, 0
        %s281 = scalar_select %p280, %s29, 0
        %p282 = scmp.lt.s32.totalorder %s30, 0
        %s283 = scalar_select %p282, %s30, 0
        %s284 = sadd.s32 %s283, %s281
        %s285 = sadd.s32 %s284, %s279
        %s286 = smul.addr %s285, 8
        %s287 = scalar_lea.vmem %s4, %s286
        %s288 = smul.u32 3, %s29
        %p289 = scmp.lt.s32.totalorder %s288, 2
        %s290 = scalar_select %p289, %s288, 2
        %s291 = scalar_lea.vmem %s2, %s290
        %s292 = smul.u32 3, %s29
        %s293 = smul.u32 3, %s29
        %p294 = scmp.lt.s32.totalorder %s28, 1
        %s295 = scalar_select %p294, %s28, 1
        %p296 = scmp.lt.s32.totalorder %s29, 0
        %s297 = scalar_select %p296, %s29, 0
        %p298 = scmp.lt.s32.totalorder %s30, 0
        %s299 = scalar_select %p298, %s30, 0
        %s300 = sadd.s32 %s299, %s297
        %s301 = sadd.s32 %s300, %s295
        %s302 = smul.addr %s301, 8
        %s303 = scalar_lea.vmem %s4, %s302
        %p305 = scmp.eq.s32.totalorder %s30, 0
        // Predicated region
        $region41: #{tpu_custom_call.1} parent=31 // pred_check
          %p306 = pneg %p305
        $region42: #{tpu_custom_call.1} parent=31 // pred_check_branch
          %308 = sbr.rel (%p306) target = $region44
        $region43: #{tpu_custom_call.1} parent=31 // pred_region
          %v309 = vld [vmem:[%s245] sm:$0x3f]
          %v311 = vcombine.high %v309, %v309
          %v313 = vunpack.c.l.s4 1983009808
          %v314 = vunpack.c.0.s8 %v313
          %v315 = vlaneseq
          %v316 = vshrl.u32 %v315, 7
          %v317 = vsub.s32 %v314, %v316
          %v318 = vrot.slane %v309, %v317
          %v320 = vunpack.c.l.s4 1983009808
          %v321 = vunpack.c.0.s8 %v320
          %v322 = vlaneseq
          %v323 = vshrl.u32 %v322, 7
          %v324 = vsub.s32 %v321, %v323
          %v325 = vrot.slane %v311, %v324
          %328 = vst [vmem:[#allocation2] sm:$0x33] %v318
          %vm329 = vcmask 254976
          %330 = vst.msk [vmem:[#allocation2 + $0x8] sm:$0x3] %vm329, %v325
          %v331 = vld [vmem:[%s245] sm:$0x3f]
          %v333 = vcombine.low %v331, %v331
          %v335 = vunpack.c.l.s4 1983009808
          %v336 = vunpack.c.0.s8 %v335
          %v337 = vlaneseq
          %v338 = vshrl.u32 %v337, 7
          %v339 = vsub.s32 %v336, %v338
          %v340 = vrot.slane %v333, %v339
          %v342 = vunpack.c.l.s4 1983009808
          %v343 = vunpack.c.0.s8 %v342
          %v344 = vlaneseq
          %v345 = vshrl.u32 %v344, 7
          %v346 = vsub.s32 %v343, %v345
          %v347 = vrot.slane %v331, %v346
          %348 = vrot.lane.b32.xlu0 %v340, 127
          %v349 = vpop.permute.xlu0 %348
          %350 = vrot.lane.b32.xlu0 %v347, 127
          %v351 = vpop.permute.xlu0 %350
          %v352 = vrot.slane %v349, 4
          %v353 = vrot.slane %v351, 4
          %vm354 = vcmask 1043456
          %v355 = vsel %vm354, %v352, %v353
          %vm356 = vcmask 1039360
          %v357 = vsel %vm356, %v349, %v355
          %360 = vst [vmem:[#allocation2] sm:$0xcc] %v357
          %vm361 = vcmask 257026
          %362 = vst.msk [vmem:[#allocation2 + $0x8] sm:$0xc] %vm361, %v351
          %v363 = vld [vmem:[%s245] sm:$0x3f]
          %v365 = vcombine.high %v363, %v363
          %v367 = vunpack.c.l.s4 1983009808
          %v368 = vunpack.c.0.s8 %v367
          %v369 = vlaneseq
          %v370 = vshrl.u32 %v369, 7
          %v371 = vsub.s32 %v368, %v370
          %v372 = vrot.slane %v363, %v371
          %v374 = vunpack.c.l.s4 1983009808
          %v375 = vunpack.c.0.s8 %v374
          %v376 = vlaneseq
          %v377 = vshrl.u32 %v376, 7
          %v378 = vsub.s32 %v375, %v377
          %v379 = vrot.slane %v365, %v378
          %380 = vrot.lane.b32.xlu0 %v372, 126
          %v381 = vpop.permute.xlu0 %380
          %382 = vrot.lane.b32.xlu0 %v379, 126
          %v383 = vpop.permute.xlu0 %382
          %v384 = vrot.slane %v381, 4
          %v385 = vrot.slane %v383, 4
          %v386 = vsel %vm354, %v384, %v385
          %vm387 = vcmask 1031168
          %v388 = vsel %vm387, %v381, %v386
          %391 = vst [vmem:[#allocation2 + $0xc] sm:$0x33] %v388
          %392 = vst.msk [vmem:[#allocation2 + $0x14] sm:$0x3] %vm329, %v383
          %v393 = vld [vmem:[%s245] sm:$0x3f]
          %v395 = vcombine.low %v393, %v393
          %v397 = vunpack.c.l.s4 1983009808
          %v398 = vunpack.c.0.s8 %v397
          %v399 = vlaneseq
          %v400 = vshrl.u32 %v399, 7
          %v401 = vsub.s32 %v398, %v400
          %v402 = vrot.slane %v395, %v401
          %v404 = vunpack.c.l.s4 1983009808
          %v405 = vunpack.c.0.s8 %v404
          %v406 = vlaneseq
          %v407 = vshrl.u32 %v406, 7
          %v408 = vsub.s32 %v405, %v407
          %v409 = vrot.slane %v393, %v408
          %410 = vrot.lane.b32.xlu0 %v402, 110
          %v411 = vpop.permute.xlu0 %410
          %412 = vrot.lane.b32.xlu0 %v409, 110
          %v413 = vpop.permute.xlu0 %412
          %v414 = vrot.slane %v411, 4
          %v415 = vrot.slane %v413, 4
          %v416 = vsel %vm354, %v414, %v415
          %vm417 = vcmask 900096
          %v418 = vsel %vm417, %v411, %v416
          %421 = vst [vmem:[#allocation2 + $0xc] sm:$0xcc] %v418
          %422 = vst.msk [vmem:[#allocation2 + $0x14] sm:$0xc] %vm361, %v413
          %v423 = vld [vmem:[%s245] sm:$0x3f]
          %v425 = vcombine.high %v423, %v423
          %v427 = vunpack.c.l.s4 1983009808
          %v428 = vunpack.c.0.s8 %v427
          %v429 = vlaneseq
          %v430 = vshrl.u32 %v429, 7
          %v431 = vsub.s32 %v428, %v430
          %v432 = vrot.slane %v423, %v431
          %v434 = vunpack.c.l.s4 1983009808
          %v435 = vunpack.c.0.s8 %v434
          %v436 = vlaneseq
          %v437 = vshrl.u32 %v436, 7
          %v438 = vsub.s32 %v435, %v437
          %v439 = vrot.slane %v425, %v438
          %440 = vrot.lane.b32.xlu0 %v432, 109
          %v441 = vpop.permute.xlu0 %440
          %442 = vrot.lane.b32.xlu0 %v439, 109
          %v443 = vpop.permute.xlu0 %442
          %v444 = vrot.slane %v441, 4
          %v445 = vrot.slane %v443, 4
          %v446 = vsel %vm354, %v444, %v445
          %vm447 = vcmask 891904
          %v448 = vsel %vm447, %v441, %v446
          %451 = vst [vmem:[#allocation2 + $0x18] sm:$0x33] %v448
          %452 = vst.msk [vmem:[#allocation2 + $0x20] sm:$0x3] %vm329, %v443
          %v453 = vld [vmem:[%s245] sm:$0x3f]
          %v455 = vcombine.low %v453, %v453
          %v457 = vunpack.c.l.s4 1983009808
          %v458 = vunpack.c.0.s8 %v457
          %v459 = vlaneseq
          %v460 = vshrl.u32 %v459, 7
          %v461 = vsub.s32 %v458, %v460
          %v462 = vrot.slane %v455, %v461
          %v464 = vunpack.c.l.s4 1983009808
          %v465 = vunpack.c.0.s8 %v464
          %v466 = vlaneseq
          %v467 = vshrl.u32 %v466, 7
          %v468 = vsub.s32 %v465, %v467
          %v469 = vrot.slane %v453, %v468
          %470 = vrot.lane.b32.xlu0 %v462, 108
          %v471 = vpop.permute.xlu0 %470
          %472 = vrot.lane.b32.xlu0 %v469, 108
          %v473 = vpop.permute.xlu0 %472
          %v474 = vrot.slane %v471, 4
          %v475 = vrot.slane %v473, 4
          %v476 = vsel %vm354, %v474, %v475
          %vm477 = vcmask 883712
          %v478 = vsel %vm477, %v471, %v476
          %481 = vst [vmem:[#allocation2 + $0x18] sm:$0xcc] %v478
          %482 = vst.msk [vmem:[#allocation2 + $0x20] sm:$0xc] %vm361, %v473
          %v483 = vld [vmem:[%s245] sm:$0x3f]
          %v485 = vcombine.high %v483, %v483
          %v487 = vunpack.c.l.s4 1983009808
          %v488 = vunpack.c.0.s8 %v487
          %v489 = vlaneseq
          %v490 = vshrl.u32 %v489, 7
          %v491 = vsub.s32 %v488, %v490
          %v492 = vrot.slane %v483, %v491
          %v494 = vunpack.c.l.s4 1983009808
          %v495 = vunpack.c.0.s8 %v494
          %v496 = vlaneseq
          %v497 = vshrl.u32 %v496, 7
          %v498 = vsub.s32 %v495, %v497
          %v499 = vrot.slane %v485, %v498
          %500 = vrot.lane.b32.xlu0 %v492, 92
          %v501 = vpop.permute.xlu0 %500
          %502 = vrot.lane.b32.xlu0 %v499, 92
          %v503 = vpop.permute.xlu0 %502
          %v504 = vrot.slane %v501, 4
          %v505 = vrot.slane %v503, 4
          %v506 = vsel %vm354, %v504, %v505
          %vm507 = vcmask 752640
          %v508 = vsel %vm507, %v501, %v506
          %511 = vst [vmem:[#allocation2 + $0x24] sm:$0x33] %v508
          %512 = vst.msk [vmem:[#allocation2 + $0x2c] sm:$0x3] %vm329, %v503
          %v513 = vld [vmem:[%s245] sm:$0x3f]
          %v515 = vcombine.low %v513, %v513
          %v517 = vunpack.c.l.s4 1983009808
          %v518 = vunpack.c.0.s8 %v517
          %v519 = vlaneseq
          %v520 = vshrl.u32 %v519, 7
          %v521 = vsub.s32 %v518, %v520
          %v522 = vrot.slane %v515, %v521
          %v524 = vunpack.c.l.s4 1983009808
          %v525 = vunpack.c.0.s8 %v524
          %v526 = vlaneseq
          %v527 = vshrl.u32 %v526, 7
          %v528 = vsub.s32 %v525, %v527
          %v529 = vrot.slane %v513, %v528
          %530 = vrot.lane.b32.xlu0 %v522, 91
          %v531 = vpop.permute.xlu0 %530
          %532 = vrot.lane.b32.xlu0 %v529, 91
          %v533 = vpop.permute.xlu0 %532
          %v534 = vrot.slane %v531, 4
          %v535 = vrot.slane %v533, 4
          %v536 = vsel %vm354, %v534, %v535
          %vm537 = vcmask 744448
          %v538 = vsel %vm537, %v531, %v536
          %541 = vst [vmem:[#allocation2 + $0x24] sm:$0xcc] %v538
          %542 = vst.msk [vmem:[#allocation2 + $0x2c] sm:$0xc] %vm361, %v533
          %v543 = vld [vmem:[%s245] sm:$0x3f]
          %v545 = vcombine.high %v543, %v543
          %v547 = vunpack.c.l.s4 1983009808
          %v548 = vunpack.c.0.s8 %v547
          %v549 = vlaneseq
          %v550 = vshrl.u32 %v549, 7
          %v551 = vsub.s32 %v548, %v550
          %v552 = vrot.slane %v543, %v551
          %v554 = vunpack.c.l.s4 1983009808
          %v555 = vunpack.c.0.s8 %v554
          %v556 = vlaneseq
          %v557 = vshrl.u32 %v556, 7
          %v558 = vsub.s32 %v555, %v557
          %v559 = vrot.slane %v545, %v558
          %560 = vrot.lane.b32.xlu0 %v552, 90
          %v561 = vpop.permute.xlu0 %560
          %562 = vrot.lane.b32.xlu0 %v559, 90
          %v563 = vpop.permute.xlu0 %562
          %v564 = vrot.slane %v561, 4
          %v565 = vrot.slane %v563, 4
          %v566 = vsel %vm354, %v564, %v565
          %vm567 = vcmask 736256
          %v568 = vsel %vm567, %v561, %v566
          %571 = vst [vmem:[#allocation2 + $0x30] sm:$0x33] %v568
          %572 = vst.msk [vmem:[#allocation2 + $0x38] sm:$0x3] %vm329, %v563
        $region44: #{tpu_custom_call.1} parent=31 // pred_fallthru
          _
        %v573 = vld [vmem:[#allocation6] sm:$0xf]
        %v574 = vld [vmem:[#allocation2] sm:$0xff]
        %v575 = vld [vmem:[#allocation2 + $0x8] sm:$0xf]
        %v576 = vld [vmem:[#allocation2 + $0xc] sm:$0xff]
        %v577 = vld [vmem:[#allocation2 + $0x14] sm:$0xf]
        %v578 = vld [vmem:[#allocation2 + $0x18] sm:$0xff]
        %v579 = vld [vmem:[#allocation2 + $0x20] sm:$0xf]
        %v580 = vld [vmem:[#allocation2 + $0x24] sm:$0xff]
        %v581 = vld [vmem:[#allocation2 + $0x2c] sm:$0xf]
        %v582 = vld [vmem:[#allocation2 + $0x30] sm:$0x33]
        %v583 = vld [vmem:[#allocation2 + $0x38] sm:$0x3]
        %v594 = vunpack.c.l.b16 %v574
        %v595 = vunpack.c.h.b16 %v574
        %v596 = vunpack.c.l.b16 %v575
        %v597 = vunpack.c.l.b16 %v576
        %v598 = vunpack.c.h.b16 %v576
        %v599 = vunpack.c.l.b16 %v577
        %v600 = vunpack.c.l.b16 %v578
        %v601 = vunpack.c.h.b16 %v578
        %v602 = vunpack.c.l.b16 %v579
        %v603 = vunpack.c.l.b16 %v580
        %v604 = vunpack.c.h.b16 %v580
        %v605 = vunpack.c.l.b16 %v581
        %v606 = vunpack.c.l.b16 %v582
        %v607 = vunpack.c.h.b16 %v582
        %v608 = vunpack.c.l.b16 %v583
        %v609 = vpack.c.b16 %v597, %v594
        %v610 = vpack.c.b16 %v598, %v595
        %v611 = vpack.c.b16 %v599, %v596
        %v612 = vpack.c.b16 %v603, %v600
        %v613 = vpack.c.b16 %v604, %v601
        %v614 = vpack.c.b16 %v605, %v602
        %v615 = vpack.c.b16 %v606, %v606
        %v616 = vpack.c.b16 %v607, %v607
        %v617 = vpack.c.b16 %v608, %v608
        %vm624 = vcmask 293888
        %v626 = vsel %vm624, %v573, 0
        %vm628 = vcmask 1041408
        %v630 = vsel %vm628, %v615, 0
        %v633 = vsel %vm628, %v616, 0
        %v636 = vsel %vm628, %v617, 0
        %638 = vmatprep.subr.bf16.mxu0 0
        %639 = vmatpush1.bf16.msra.mxu0 0
        %640 = vmatprep.subr.bf16.mxu0 0
        %641 = vmatpush1.bf16.msra.mxu0 0
        %642 = vmatprep.subr.bf16.mxu0 0
        %643 = vmatpush1.bf16.msra.mxu0 0
        %644 = vmatprep.subr.bf16.mxu0 0
        %645 = vmatpush1.bf16.msra.mxu0 0
        %646 = vmatprep.subr.bf16.mxu0 0
        %647 = vmatpush1.bf16.msra.mxu0 0
        %648 = vmatprep.subr.bf16.mxu0 %v633
        %649 = vmatpush1.bf16.msra.mxu0 %v630
        %650 = vmatprep.subr.bf16.mxu0 %v613
        %651 = vmatpush1.bf16.msra.mxu0 %v612
        %652 = vmatprep.subr.bf16.mxu0 %v610
        %653 = vmatpush1.bf16.msra.mxu0 %v609
        %654 = vmatprep.subr.bf16.mxu0 0
        %655 = vmatpush2.bf16.msra.mxu0 0
        %656 = vmatprep.subr.bf16.mxu0 0
        %657 = vmatpush2.bf16.msra.mxu0 0
        %658 = vmatprep.subr.bf16.mxu0 0
        %659 = vmatpush2.bf16.msra.mxu0 0
        %660 = vmatprep.subr.bf16.mxu0 0
        %661 = vmatpush2.bf16.msra.mxu0 0
        %662 = vmatprep.subr.bf16.mxu0 0
        %663 = vmatpush2.bf16.msra.mxu0 0
        %664 = vmatprep.subr.bf16.mxu0 0
        %665 = vmatpush2.bf16.msra.mxu0 0
        %666 = vmatprep.subr.bf16.mxu0 0
        %667 = vmatpush2.bf16.msra.mxu0 0
        %668 = vmatprep.subr.bf16.mxu0 0
        %669 = vmatpush2.bf16.msra.mxu0 0
        %670 = vmatprep.mubr.bf16.mxu0 0
        %671 = vmatmul.mubr.bf16.gmra.mxu0 %v626
        %v672 = vpop.f32.mrf.mxu0
        %v673 = vadd.f32 0.0, %v672
        %v674 = vpop.f32.mrf.mxu0
        %v675 = vadd.f32 0.0, %v674
        %v676 = vpop.f32.mrf.mxu0
        %v677 = vpop.f32.mrf.mxu0
        %678 = vdwg.mxu0
        %679 = vmatprep.subr.bf16.mxu0 0
        %680 = vmatpush1.bf16.msra.mxu0 0
        %681 = vmatprep.subr.bf16.mxu0 0
        %682 = vmatpush1.bf16.msra.mxu0 0
        %683 = vmatprep.subr.bf16.mxu0 0
        %684 = vmatpush1.bf16.msra.mxu0 0
        %685 = vmatprep.subr.bf16.mxu0 0
        %686 = vmatpush1.bf16.msra.mxu0 0
        %687 = vmatprep.subr.bf16.mxu0 0
        %688 = vmatpush1.bf16.msra.mxu0 0
        %689 = vmatprep.subr.bf16.mxu0 0
        %690 = vmatpush1.bf16.msra.mxu0 %v636
        %691 = vmatprep.subr.bf16.mxu0 0
        %692 = vmatpush1.bf16.msra.mxu0 %v614
        %693 = vmatprep.subr.bf16.mxu0 0
        %694 = vmatpush1.bf16.msra.mxu0 %v611
        %695 = vmatprep.subr.bf16.mxu0 0
        %696 = vmatpush2.bf16.msra.mxu0 0
        %697 = vmatprep.subr.bf16.mxu0 0
        %698 = vmatpush2.bf16.msra.mxu0 0
        %699 = vmatprep.subr.bf16.mxu0 0
        %700 = vmatpush2.bf16.msra.mxu0 0
        %701 = vmatprep.subr.bf16.mxu0 0
        %702 = vmatpush2.bf16.msra.mxu0 0
        %703 = vmatprep.subr.bf16.mxu0 0
        %704 = vmatpush2.bf16.msra.mxu0 0
        %705 = vmatprep.subr.bf16.mxu0 0
        %706 = vmatpush2.bf16.msra.mxu0 0
        %707 = vmatprep.subr.bf16.mxu0 0
        %708 = vmatpush2.bf16.msra.mxu0 0
        %709 = vmatprep.subr.bf16.mxu0 0
        %710 = vmatpush2.bf16.msra.mxu0 0
        %711 = vmatprep.mubr.bf16.mxu0 0
        %712 = vmatmul.mubr.bf16.gmra.mxu0 %v626
        %v713 = vpop.f32.mrf.mxu0
        %v714 = vadd.f32 0.0, %v713
        %v715 = vpop.f32.mrf.mxu0
        %v716 = vpop.f32.mrf.mxu0
        %v717 = vpop.f32.mrf.mxu0
        %718 = vdwg.mxu0
        %v719 = vpack.c.bf16 %v673, %v673
        %v720 = vpack.c.bf16 %v675, %v675
        %v721 = vpack.c.bf16 %v714, %v714
        %v725 = vunpack.c.l.b16 %v719
        %v726 = vunpack.c.l.b16 %v720
        %v727 = vunpack.c.l.b16 %v721
        %v728 = vpack.c.b16 %v726, %v725
        %v729 = vpack.c.b16 %v727, %v727
        %732 = vst [vmem:[%s275] sm:$0xff] %v728
        %vm733 = vcmask 257024
        %734 = vst.msk [vmem:[%s275 + $0x8] sm:$0xf] %vm733, %v729
        %v735 = vld [vmem:[%s291] sm:$0x7]
        %v737 = vlaneseq
        %v738 = vshrl.u32 %v737, 7
        %v739 = vsub.s32 0, %v738
        %v740 = vrot.slane %v735, %v739
        %v741 = vlaneseq
        %v742 = vshrl.u32 %v741, 7
        %v743 = vsub.s32 1, %v742
        %v744 = vrot.slane %v735, %v743
        %v745 = vlaneseq
        %v746 = vshrl.u32 %v745, 7
        %v747 = vsub.s32 2, %v746
        %v748 = vrot.slane %v735, %v747
        %v752 = vmul.f32 %v673, %v740
        %v753 = vmul.f32 %v675, %v744
        %v754 = vmul.f32 %v714, %v748
        %v755 = vadd.f32 %v752, %v753
        %vm756 = vcmask 261120
        %v757 = vsel %vm756, %v754, 0.0
        %v758 = vadd.f32 %v755, %v757
        %759 = vadd.xlane.f32.xlu0 %v758
        %v760 = vpop.xlane.xlu0 %759
        %vm761 = vcmask 7168
        %762 = vst.msk [vmem:[%s303] sm:$0xff] %vm761, %v760
        %v763 = vmul.f32 %v752, %v673
        %v764 = vmul.f32 %v753, %v675
        %v765 = vmul.f32 %v754, %v714
        %v766 = vadd.f32 %v763, %v764
        %v767 = vsel %vm756, %v765, 0.0
        %v768 = vadd.f32 %v766, %v767
        %769 = vadd.xlane.f32.xlu0 %v768
        %v770 = vpop.xlane.xlu0 %769
        %vm771 = vcmask 15368
        %772 = vst.msk [vmem:[%s303] sm:$0xff] %vm771, %v770
        %s773 = sand.u32 %s132, 1
        %s774 = scalar_lea.sflag [#allocation5], %s773
        %s775 = sand.u32 %s132, 1
        %s776 = smul.addr %s775, 12
        %s777 = scalar_lea.vmem [#allocation8], %s776
        %p778 = scmp.lt.s32.totalorder %s28, 1
        %s779 = scalar_select %p778, %s28, 1
        %p780 = scmp.lt.s32.totalorder %s29, 0
        %s781 = scalar_select %p780, %s29, 0
        %p782 = scmp.lt.s32.totalorder %s30, 0
        %s783 = scalar_select %p782, %s30, 0
        %s784 = sadd.s32 %s783, %s781
        %s785 = sadd.s32 %s784, %s779
        %s786 = smul.addr %s785, 8
        %s787 = scalar_lea.vmem %s4, %s786
        // Predicated region
        $region45: #{tpu_custom_call.1} parent=31 // pred_check
          %p788 = pneg %p142
        $region46: #{tpu_custom_call.1} parent=31 // pred_check_branch
          %790 = sbr.rel (%p788) target = $region48
        $region47: #{tpu_custom_call.1} parent=31 // pred_region
          %s791 = smul.u32 3, %s29
          %s793 = ssub.s32 192, 192
          %794 = vsyncadd %s774, %s793
          %s795 = smul.addr %s30, 3
          %s796 = sadd.s32 %s791, %s795
          %s797 = smul.addr %s28, 3
          %s798 = sadd.s32 %s796, %s797
          %s799 = smul.addr %s798, 64
          %s800 = scalar_lea.hbm %s3, %s799
          %s802 = sshll.u32 %s777, 4
          %s803 = int_to_ptr.vmem [resolvable:$true] %s802
          %805 = dma.vmem_to_hbm [thread:$0]  %s803, 192, %s800, %s774
        $region48: #{tpu_custom_call.1} parent=31 // pred_fallthru
          _
        // Predicated region
        $region49: #{tpu_custom_call.1} parent=31 // pred_check
          %p806 = pneg %p172
        $region50: #{tpu_custom_call.1} parent=31 // pred_check_branch
          %808 = sbr.rel (%p806) target = $region52
        $region51: #{tpu_custom_call.1} parent=31 // pred_region
          _
        $region52: #{tpu_custom_call.1} parent=31 // pred_fallthru
          _
      $region32: #{tpu_custom_call.1} parent=5 // pred_fallthru
        _
      %p809 = scmp.le.s32.totalorder 2, %s18
      // Predicated region
      $region53: #{tpu_custom_call.1} parent=5 // pred_check
        %p810 = pneg %p809
      $region54: #{tpu_custom_call.1} parent=5 // pred_check_branch
        %812 = sbr.rel (%p810) target = $region56
      $region55: #{tpu_custom_call.1} parent=5 // pred_region
        %s813 = ssub.s32 %s18, 2
        // Predicated region
        $region57: #{tpu_custom_call.1} parent=55 // pred_check
          %p814 = pneg %p148
        $region58: #{tpu_custom_call.1} parent=55 // pred_check_branch
          %816 = sbr.rel (%p814) target = $region60
        $region59: #{tpu_custom_call.1} parent=55 // pred_region
          %s817 = sand.u32 %s133, 1
          %s818 = scalar_lea.sflag [#allocation5], %s817
          %s819 = sand.u32 %s133, 1
          %s820 = smul.addr %s819, 12
          %s821 = scalar_lea.vmem [#allocation8], %s820
          %822 = dma.done %s818, 192
        $region60: #{tpu_custom_call.1} parent=55 // pred_fallthru
          _
        // Predicated region
        $region61: #{tpu_custom_call.1} parent=55 // pred_check
          %p823 = pneg %p178
        $region62: #{tpu_custom_call.1} parent=55 // pred_check_branch
          %825 = sbr.rel (%p823) target = $region64
        $region63: #{tpu_custom_call.1} parent=55 // pred_region
          %p826 = scmp.lt.s32.totalorder %s31, 1
          %s827 = scalar_select %p826, %s31, 1
          %p828 = scmp.lt.s32.totalorder %s32, 0
          %s829 = scalar_select %p828, %s32, 0
          %p830 = scmp.lt.s32.totalorder %s33, 0
          %s831 = scalar_select %p830, %s33, 0
          %s832 = sadd.s32 %s831, %s829
          %s833 = sadd.s32 %s832, %s827
          %s834 = smul.addr %s833, 8
          %s835 = scalar_lea.vmem %s4, %s834
        $region64: #{tpu_custom_call.1} parent=55 // pred_fallthru
          _
      $region56: #{tpu_custom_call.1} parent=5 // pred_fallthru
        _
    $region6: #{tpu_custom_call.1} parent=1 // loop_footer
      %s22 = sadd.s32 1, %s18
    $region7: #{tpu_custom_call.1} parent=1 // loop_footer_branch
      %17 = sbr.rel target = $region3
    $region8: #{tpu_custom_call.1} parent=1 // loop_exit
      _
    %836 = vsyncpa [#allocation4], 1
    %s837 = scalar_lea.sflag [#allocation4], 1
    %838 = vsyncpa %s837, 1
    %839 = vsyncpa [#allocation7], 1
    %840 = vsyncpa [#allocation5], 1
    %s841 = scalar_lea.sflag [#allocation5], 1
    %842 = vsyncpa %s841, 1

</llo_original>
